<compile_context>
chip_gen: v6e
topology: v6e:2x2x1
jax: 0.10.0
libtpu: 0.0.40
codegen_flags: <defaults>
</compile_context>

<pallas_src>
import jax
import jax.numpy as jnp
from jax import lax
from jax.experimental import pallas as pl
from jax.experimental.pallas import tpu as pltpu


def _make_pool_mlp_kernel(n_points: int, tile_n: int, k_max: int, f_dim: int):
    """Build the fused pooling+MLP kernel. n_points/tile_n/k_max/f_dim are static."""
    needs_tail_mask = (n_points % tile_n) != 0

    def kernel(labels_ref, feat_ref, coord_ref, w1_ref, w2_ref, w3_ref, b3_ref,
               out_ref, acc_ref):
        step = pl.program_id(0)

        @pl.when(step == 0)
        def _():
            acc_ref[...] = jnp.zeros_like(acc_ref)

        tn = feat_ref.shape[0]
        lab = labels_ref[...]                                    # (1, Tn) int32
        feat = feat_ref[...]                                     # (Tn, F) f32
        coord = coord_ref[...]                                   # (Tn, 3) f32

        if needs_tail_mask:
            # Last block is partial: contents past N are unspecified.  Force tail labels to
            # -1 (match nothing) and zero tail data rows so NaN/Inf garbage cannot leak in.
            n_valid = n_points - step * tn                       # traced scalar
            pos_row = lax.broadcasted_iota(jnp.int32, (1, tn), 1)
            pos_col = lax.broadcasted_iota(jnp.int32, (tn, 1), 0)
            lab = jnp.where(pos_row < n_valid, lab, -1)
            valid_col = pos_col < n_valid
            feat = jnp.where(valid_col, feat, 0.0)
            coord = jnp.where(valid_col, coord, 0.0)

        # one-hot instance membership; label -1 (background / tail) and any label >= k_max
        # match no row, so they contribute nothing.
        iota_k = lax.broadcasted_iota(jnp.int32, (k_max, tn), 0)
        mask = (iota_k == lab).astype(jnp.float32)               # (K, Tn)

        # scatter-sum: feature/coordinate sums on the MXU, point counts on the XLU.
        acc_ref[:, :f_dim] += jnp.dot(mask, feat, preferred_element_type=jnp.float32)
        acc_ref[:, f_dim:f_dim + 3] += jnp.dot(mask, coord,
                                               preferred_element_type=jnp.float32)
        acc_ref[:, f_dim + 3:] += jnp.sum(mask, axis=-1, keepdims=True)

        @pl.when(step == pl.num_programs(0) - 1)
        def _():
            acc = acc_ref[...]
            cnt = acc[:, f_dim + 3:f_dim + 4]                    # points per instance
            # one reciprocal, then multiplies (empty instances clamp to count 1 -> zero mean)
            inv = pl.reciprocal(jnp.maximum(cnt, 1.0), approx=False)
            means = acc[:, :f_dim + 3] * inv
            emb = means[:, :f_dim]                               # masked average pooling
            cent = means[:, f_dim:f_dim + 3]                     # scatter_mean of coordinates
            # MLP: Linear(F,64,no bias) -> ReLU -> Linear(64,64,no bias) -> ReLU -> Linear(64,C)+b
            h = jnp.maximum(jnp.dot(emb, w1_ref[...],
                                    preferred_element_type=jnp.float32), 0.0)
            h = jnp.maximum(jnp.dot(h, w2_ref[...],
                                    preferred_element_type=jnp.float32), 0.0)
            y = jnp.dot(h, w3_ref[...], preferred_element_type=jnp.float32) + b3_ref[...]
            # combined output slab: [emb | centroid | count | mlp]
            out_ref[...] = jnp.concatenate([emb, cent, cnt, y], axis=1)

    return kernel


def masked_average_pooling(features, coords, labels, params, *, k_max, tile_n=None):
    """Fused pooling + MLP Pallas kernel. Returns (emb, centroids, counts, mlp_out).

    Notes:
      * k_max must be an upper bound on max(labels)+1; larger labels are silently dropped
        (assert this on the wrapper side if misconfiguration is a concern).
      * empty instances return count=0 with zero embedding / centroid (mean clamped at 1);
        their mlp_out equals the final-layer bias, matching the dense reference.
    """
    N, F = features.shape
    C = params["w3"].shape[1]

    if tile_n is None:
        # Single full block for small clouds (no partial blocks, no tail masking); cap at
        # 4096 for large clouds -- the grid loop is step-overhead bound, not HBM/MXU bound.
        tile_n = N if N <= 4096 else 4096
    n_steps = pl.cdiv(N, tile_n)

    features = features.astype(jnp.float32)
    coords = coords.astype(jnp.float32)
    lab = labels.astype(jnp.int32).reshape(1, N)

    W = F + 3 + 1 + C   # [emb | centroid | count | mlp]
    kernel = _make_pool_mlp_kernel(N, tile_n, k_max, F)
    out = pl.pallas_call(
        kernel,
        out_shape=jax.ShapeDtypeStruct((k_max, W), jnp.float32),
        grid_spec=pltpu.PrefetchScalarGridSpec(
            num_scalar_prefetch=0,
            grid=(n_steps,),
            in_specs=[
                pl.BlockSpec((1, tile_n), lambda n: (0, n)),      # labels
                pl.BlockSpec((tile_n, F), lambda n: (n, 0)),      # features
                pl.BlockSpec((tile_n, 3), lambda n: (n, 0)),      # coords
                # MLP weights: constant index_map -> DMA'd once, resident in VMEM (~26 KB)
                pl.BlockSpec((F, 64), lambda n: (0, 0)),          # w1
                pl.BlockSpec((64, 64), lambda n: (0, 0)),         # w2
                pl.BlockSpec((64, C), lambda n: (0, 0)),          # w3
                pl.BlockSpec((1, C), lambda n: (0, 0)),           # b3
            ],
            out_specs=pl.BlockSpec((k_max, W), lambda n: (0, 0)),
            scratch_shapes=[pltpu.VMEM((k_max, F + 4), jnp.float32)],
        ),
        compiler_params=pltpu.CompilerParams(
            dimension_semantics=("arbitrary",),       # single reduction axis over point tiles
            vmem_limit_bytes=32 * 1024 * 1024),       # explicit budget (v7x-safe, raises v5e)
    )(lab, features, coords, params["w1"], params["w2"], params["w3"], params["b3"])

    emb = out[:, :F]
    cent = out[:, F:F + 3]
    cnt = out[:, F + 3:F + 4]
    mlp_out = out[:, F + 4:]
    return emb, cent, cnt, mlp_out


if __name__ == "__main__":
    key = jax.random.PRNGKey(0)
    N, F, C, K_MAX = 400, 32, 6, 8   # num_features=32, out_channels=6, up to 8 instances
    k_feat, k_coord, k_lab, k1, k2, k3, kb = jax.random.split(key, 7)

    features = jax.random.normal(k_feat, (N, F), jnp.float32)
    coords = jax.random.normal(k_coord, (N, 3), jnp.float32)
    labels = jax.random.randint(k_lab, (N,), -1, 6)   # -1 = background, 0..5 = instances
    assert int(labels.max()) < K_MAX, "k_max must upper-bound the number of instances"

    # deterministic parameter init (mlp: Linear(F,64,F)->ReLU->Linear(64,64,F)->ReLU->Linear(64,C,T))
    params = {
        "w1": jax.random.normal(k1, (F, 64), jnp.float32) / jnp.sqrt(F),
        "w2": jax.random.normal(k2, (64, 64), jnp.float32) / 8.0,
        "w3": jax.random.normal(k3, (64, C), jnp.float32) / 8.0,
        "b3": jax.random.normal(kb, (1, C), jnp.float32) * 0.01,
    }

    # keep the output slicing inside jit so XLA fuses it with the pallas_call epilogue
    pooled_fn = jax.jit(masked_average_pooling, static_argnames=("k_max", "tile_n"))
    emb, cent, cnt, mlp_out = pooled_fn(features, coords, labels, params, k_max=K_MAX)
    jax.block_until_ready(mlp_out)

    # plain-JAX reference check of the kernel semantics (highest precision to match f32 MXU)
    hi = jax.lax.Precision.HIGHEST
    onehot = (labels.astype(jnp.int32)[None, :] == jnp.arange(K_MAX)[:, None]).astype(jnp.float32)
    counts_ref = onehot.sum(1, keepdims=True)
    safe = jnp.maximum(counts_ref, 1.0)
    emb_ref = jnp.matmul(onehot, features, precision=hi) / safe
    cent_ref = jnp.matmul(onehot, coords, precision=hi) / safe
    h = jnp.maximum(jnp.matmul(emb_ref, params["w1"], precision=hi), 0.0)
    h = jnp.maximum(jnp.matmul(h, params["w2"], precision=hi), 0.0)
    out_ref = jnp.matmul(h, params["w3"], precision=hi) + params["b3"]
    assert jnp.allclose(emb, emb_ref, atol=1e-4), "embeddings mismatch"
    assert jnp.allclose(cent, cent_ref, atol=1e-4), "centroids mismatch"
    assert jnp.allclose(cnt[:, 0], counts_ref[:, 0], atol=1e-4), "counts mismatch"
    assert jnp.allclose(mlp_out, out_ref, atol=1e-3), "mlp output mismatch"

    # glue mirroring the PointTensor bookkeeping (single batch here):
    num_instances = int(labels.max()) + 1
    batch_counts = jnp.array([num_instances], jnp.int32)   # max_ids - prev, single batch
    out_centroids = cent[:num_instances]
    out_features = mlp_out[:num_instances]
    # TODO(synk): `prototypes` (ragged stacking of per-instance point subsets) is a
    # data-dependent regrouping with no clean dense Pallas equivalent; the per-instance
    # mean embeddings are `emb[:num_instances]`.
    _ = (out_centroids, out_features, batch_counts)

    print("KERNEL_OK")
</pallas_src>

<mosaic_0001>
module attributes {stable_mosaic.version = 11 : i64} {
  func.func @kernel(%arg0: i32, %arg1: memref<1x400xi32, #tpu.memory_space<vmem>>, %arg2: memref<400x32xf32, #tpu.memory_space<vmem>>, %arg3: memref<400x3xf32, #tpu.memory_space<vmem>>, %arg4: memref<32x64xf32, #tpu.memory_space<vmem>>, %arg5: memref<64x64xf32, #tpu.memory_space<vmem>>, %arg6: memref<64x6xf32, #tpu.memory_space<vmem>>, %arg7: memref<1x6xf32, #tpu.memory_space<vmem>>, %arg8: memref<8x42xf32, #tpu.memory_space<vmem>>, %arg9: memref<8x36xf32, #tpu.memory_space<vmem>>) attributes {dimension_semantics = [#tpu.dimension_semantics<arbitrary>], iteration_bounds = array<i64: 1>, scalar_prefetch = 0 : i64, scratch_operands = 1 : i64, tpu.core_type = #tpu.core_type<tc>, window_params = [{transform_indices = @transform_0, window_bounds = array<i64: 1, 400>}, {transform_indices = @transform_1, window_bounds = array<i64: 400, 32>}, {transform_indices = @transform_2, window_bounds = array<i64: 400, 3>}, {pipeline_mode = #tpu.pipeline_mode<synchronous>, transform_indices = @transform_3, window_bounds = array<i64: 32, 64>}, {pipeline_mode = #tpu.pipeline_mode<synchronous>, transform_indices = @transform_4, window_bounds = array<i64: 64, 64>}, {pipeline_mode = #tpu.pipeline_mode<synchronous>, transform_indices = @transform_5, window_bounds = array<i64: 64, 6>}, {pipeline_mode = #tpu.pipeline_mode<synchronous>, transform_indices = @transform_6, window_bounds = array<i64: 1, 6>}, {pipeline_mode = #tpu.pipeline_mode<synchronous>, transform_indices = @transform_7, window_bounds = array<i64: 8, 42>}]} {
    %c0_i32 = arith.constant 0 : i32
    %0 = arith.cmpi eq, %arg0, %c0_i32 : i32
    %1 = arith.extui %0 : i1 to i32
    %c0_i32_0 = arith.constant 0 : i32
    %2 = arith.cmpi ne, %1, %c0_i32_0 : i32
    scf.if %2 {
      %cst_20 = arith.constant 0.000000e+00 : f32
      %27 = vector.broadcast %cst_20 : f32 to vector<8x36xf32>
      %c0_21 = arith.constant 0 : index
      %c0_22 = arith.constant 0 : index
      %28 = vector.load %arg9[%c0_21, %c0_22] : memref<8x36xf32, #tpu.memory_space<vmem>>, vector<8x36xf32>
      tpu.vector_store %arg9[%c0_21, %c0_22], %27 {strides = array<i32>} : memref<8x36xf32, #tpu.memory_space<vmem>>, vector<8x36xf32>,
    } else {
    }
    %c0 = arith.constant 0 : index
    %c0_1 = arith.constant 0 : index
    %3 = vector.load %arg1[%c0, %c0_1] : memref<1x400xi32, #tpu.memory_space<vmem>>, vector<1x400xi32>
    %c0_2 = arith.constant 0 : index
    %c0_3 = arith.constant 0 : index
    %4 = vector.load %arg2[%c0_2, %c0_3] : memref<400x32xf32, #tpu.memory_space<vmem>>, vector<400x32xf32>
    %c0_4 = arith.constant 0 : index
    %c0_5 = arith.constant 0 : index
    %5 = vector.load %arg3[%c0_4, %c0_5] : memref<400x3xf32, #tpu.memory_space<vmem>>, vector<400x3xf32>
    %6 = tpu.iota {dimensions = array<i32: 0>} : vector<8x400xi32>
    %7 = vector.broadcast %3 : vector<1x400xi32> to vector<8x400xi32>
    %8 = arith.cmpi eq, %6, %7 : vector<8x400xi32>
    %9 = arith.extui %8 : vector<8x400xi1> to vector<8x400xi32>
    %10 = arith.sitofp %9 : vector<8x400xi32> to vector<8x400xf32>
    %c0_6 = arith.constant 0 : index
    %c0_7 = arith.constant 0 : index
    %11 = vector.load %arg9[%c0_6, %c0_7] : memref<8x36xf32, #tpu.memory_space<vmem>>, vector<8x32xf32>
    %cst = arith.constant dense<0.000000e+00> : vector<8x32xf32>
    %12 = tpu.matmul %10, %4, %cst {dimension_numbers = #tpu.dot_dimension_numbers<[1], [0], [0], [1], [0, 0, 1, 1], [], []>} : vector<8x400xf32>, vector<400x32xf32>, vector<8x32xf32> -> vector<8x32xf32>
    %13 = arith.addf %11, %12 : vector<8x32xf32>
    %c0_8 = arith.constant 0 : index
    %c0_9 = arith.constant 0 : index
    %14 = vector.load %arg9[%c0_8, %c0_9] : memref<8x36xf32, #tpu.memory_space<vmem>>, vector<8x32xf32>
    tpu.vector_store %arg9[%c0_8, %c0_9], %13 {strides = array<i32>} : memref<8x36xf32, #tpu.memory_space<vmem>>, vector<8x32xf32>,
    %c0_10 = arith.constant 0 : index
    %c32 = arith.constant 32 : index
    %15 = vector.load %arg9[%c0_10, %c32] : memref<8x36xf32, #tpu.memory_space<vmem>>, vector<8x3xf32>
    %cst_11 = arith.constant dense<0.000000e+00> : vector<8x3xf32>
    %16 = tpu.matmul %10, %5, %cst_11 {dimension_numbers = #tpu.dot_dimension_numbers<[1], [0], [0], [1], [0, 0, 1, 1], [], []>} : vector<8x400xf32>, vector<400x3xf32>, vector<8x3xf32> -> vector<8x3xf32>
    %17 = arith.addf %15, %16 : vector<8x3xf32>
    %c0_12 = arith.constant 0 : index
    %c32_13 = arith.constant 32 : index
    %18 = vector.load %arg9[%c0_12, %c32_13] : memref<8x36xf32, #tpu.memory_space<vmem>>, vector<8x3xf32>
    tpu.vector_store %arg9[%c0_12, %c32_13], %17 {strides = array<i32>} : memref<8x36xf32, #tpu.memory_space<vmem>>, vector<8x3xf32>,
    %c0_14 = arith.constant 0 : index
    %c35 = arith.constant 35 : index
    %19 = vector.load %arg9[%c0_14, %c35] : memref<8x36xf32, #tpu.memory_space<vmem>>, vector<8x1xf32>
    %cst_15 = arith.constant dense<0.000000e+00> : vector<8xf32>
    %20 = vector.multi_reduction <add>, %10, %cst_15 [1] : vector<8x400xf32> to vector<8xf32>
    %21 = vector.shape_cast %20 : vector<8xf32> to vector<8x1xf32>
    %22 = arith.addf %19, %21 : vector<8x1xf32>
    %c0_16 = arith.constant 0 : index
    %c35_17 = arith.constant 35 : index
    %23 = vector.load %arg9[%c0_16, %c35_17] : memref<8x36xf32, #tpu.memory_space<vmem>>, vector<8x1xf32>
    tpu.vector_store %arg9[%c0_16, %c35_17], %22 {strides = array<i32>} : memref<8x36xf32, #tpu.memory_space<vmem>>, vector<8x1xf32>,
    %c0_i32_18 = arith.constant 0 : i32
    %24 = arith.cmpi eq, %arg0, %c0_i32_18 : i32
    %25 = arith.extui %24 : i1 to i32
    %c0_i32_19 = arith.constant 0 : i32
    %26 = arith.cmpi ne, %25, %c0_i32_19 : i32
    scf.if %26 {
      %c0_20 = arith.constant 0 : index
      %c0_21 = arith.constant 0 : index
      %27 = vector.load %arg9[%c0_20, %c0_21] : memref<8x36xf32, #tpu.memory_space<vmem>>, vector<8x36xf32>
      %28 = vector.extract_strided_slice %27 {offsets = [0, 35], sizes = [8, 1], strides = [1, 1]} : vector<8x36xf32> to vector<8x1xf32>
      %cst_22 = arith.constant 1.000000e+00 : f32
      %29 = vector.broadcast %cst_22 : f32 to vector<8x1xf32>
      %30 = arith.maximumf %28, %29 : vector<8x1xf32>
      %31 = tpu.reciprocal %30 : vector<8x1xf32> -> vector<8x1xf32>
      %32 = vector.extract_strided_slice %27 {offsets = [0, 0], sizes = [8, 35], strides = [1, 1]} : vector<8x36xf32> to vector<8x35xf32>
      %33 = vector.broadcast %31 : vector<8x1xf32> to vector<8x35xf32>
      %34 = arith.mulf %32, %33 : vector<8x35xf32>
      %35 = vector.extract_strided_slice %34 {offsets = [0, 0], sizes = [8, 32], strides = [1, 1]} : vector<8x35xf32> to vector<8x32xf32>
      %36 = vector.extract_strided_slice %34 {offsets = [0, 32], sizes = [8, 3], strides = [1, 1]} : vector<8x35xf32> to vector<8x3xf32>
      %c0_23 = arith.constant 0 : index
      %c0_24 = arith.constant 0 : index
      %37 = vector.load %arg4[%c0_23, %c0_24] : memref<32x64xf32, #tpu.memory_space<vmem>>, vector<32x64xf32>
      %cst_25 = arith.constant dense<0.000000e+00> : vector<8x64xf32>
      %38 = tpu.matmul %35, %37, %cst_25 {dimension_numbers = #tpu.dot_dimension_numbers<[1], [0], [0], [1], [0, 0, 1, 1], [], []>} : vector<8x32xf32>, vector<32x64xf32>, vector<8x64xf32> -> vector<8x64xf32>
      %cst_26 = arith.constant 0.000000e+00 : f32
      %39 = vector.broadcast %cst_26 : f32 to vector<8x64xf32>
      %40 = arith.maximumf %38, %39 : vector<8x64xf32>
      %c0_27 = arith.constant 0 : index
      %c0_28 = arith.constant 0 : index
      %41 = vector.load %arg5[%c0_27, %c0_28] : memref<64x64xf32, #tpu.memory_space<vmem>>, vector<64x64xf32>
      %cst_29 = arith.constant dense<0.000000e+00> : vector<8x64xf32>
      %42 = tpu.matmul %40, %41, %cst_29 {dimension_numbers = #tpu.dot_dimension_numbers<[1], [0], [0], [1], [0, 0, 1, 1], [], []>} : vector<8x64xf32>, vector<64x64xf32>, vector<8x64xf32> -> vector<8x64xf32>
      %cst_30 = arith.constant 0.000000e+00 : f32
      %43 = vector.broadcast %cst_30 : f32 to vector<8x64xf32>
      %44 = arith.maximumf %42, %43 : vector<8x64xf32>
      %c0_31 = arith.constant 0 : index
      %c0_32 = arith.constant 0 : index
      %45 = vector.load %arg6[%c0_31, %c0_32] : memref<64x6xf32, #tpu.memory_space<vmem>>, vector<64x6xf32>
      %cst_33 = arith.constant dense<0.000000e+00> : vector<8x6xf32>
      %46 = tpu.matmul %44, %45, %cst_33 {dimension_numbers = #tpu.dot_dimension_numbers<[1], [0], [0], [1], [0, 0, 1, 1], [], []>} : vector<8x64xf32>, vector<64x6xf32>, vector<8x6xf32> -> vector<8x6xf32>
      %c0_34 = arith.constant 0 : index
      %c0_35 = arith.constant 0 : index
      %47 = vector.load %arg7[%c0_34, %c0_35] : memref<1x6xf32, #tpu.memory_space<vmem>>, vector<1x6xf32>
      %48 = vector.broadcast %47 : vector<1x6xf32> to vector<8x6xf32>
      %49 = arith.addf %46, %48 : vector<8x6xf32>
      %50 = tpu.concatenate %35, %36, %28, %49 in 1 : vector<8x32xf32>, vector<8x3xf32>, vector<8x1xf32>, vector<8x6xf32> -> vector<8x42xf32>
      %c0_36 = arith.constant 0 : index
      %c0_37 = arith.constant 0 : index
      %51 = vector.load %arg8[%c0_36, %c0_37] : memref<8x42xf32, #tpu.memory_space<vmem>>, vector<8x42xf32>
      tpu.vector_store %arg8[%c0_36, %c0_37], %50 {strides = array<i32>} : memref<8x42xf32, #tpu.memory_space<vmem>>, vector<8x42xf32>,
    } else {
    }
    return
  }
  func.func @transform_0(%arg0: i32) -> (i32, i32) {
    %c0_i32 = arith.constant 0 : i32
    %c0_i32_0 = arith.constant 0 : i32
    return %c0_i32, %arg0 : i32, i32
  }
  func.func @transform_1(%arg0: i32) -> (i32, i32) {
    %c0_i32 = arith.constant 0 : i32
    %c0_i32_0 = arith.constant 0 : i32
    return %arg0, %c0_i32 : i32, i32
  }
  func.func @transform_2(%arg0: i32) -> (i32, i32) {
    %c0_i32 = arith.constant 0 : i32
    %c0_i32_0 = arith.constant 0 : i32
    return %arg0, %c0_i32 : i32, i32
  }
  func.func @transform_3(%arg0: i32) -> (i32, i32) {
    %c0_i32 = arith.constant 0 : i32
    %c0_i32_0 = arith.constant 0 : i32
    %c0_i32_1 = arith.constant 0 : i32
    return %c0_i32, %c0_i32_0 : i32, i32
  }
  func.func @transform_4(%arg0: i32) -> (i32, i32) {
    %c0_i32 = arith.constant 0 : i32
    %c0_i32_0 = arith.constant 0 : i32
    %c0_i32_1 = arith.constant 0 : i32
    return %c0_i32, %c0_i32_0 : i32, i32
  }
  func.func @transform_5(%arg0: i32) -> (i32, i32) {
    %c0_i32 = arith.constant 0 : i32
    %c0_i32_0 = arith.constant 0 : i32
    %c0_i32_1 = arith.constant 0 : i32
    return %c0_i32, %c0_i32_0 : i32, i32
  }
  func.func @transform_6(%arg0: i32) -> (i32, i32) {
    %c0_i32 = arith.constant 0 : i32
    %c0_i32_0 = arith.constant 0 : i32
    %c0_i32_1 = arith.constant 0 : i32
    return %c0_i32, %c0_i32_0 : i32, i32
  }
  func.func @transform_7(%arg0: i32) -> (i32, i32) {
    %c0_i32 = arith.constant 0 : i32
    %c0_i32_0 = arith.constant 0 : i32
    %c0_i32_1 = arith.constant 0 : i32
    return %c0_i32, %c0_i32_0 : i32, i32
  }
}

</mosaic_0001>

<llo_original>
// kernel: masked_average_pooling.1
$region0: #{masked_average_pooling.1}
  #allocation0 [shape = 'u32[]', space=smem, size = 0x4, offset = 0x4, fixed_abs, tag = 'smem constant byte address 0x4 - core index']
  #allocation1 [shape = 'u32[144,128]{1,0:T(1,128)}', space=vmem, size = 0x12000, scoped, tag = 'internal scratch']
  #allocation2 [shape = 'f32[8,36]{1,0:T(8,128)}', space=vmem, size = 0x1000, scoped, tag = 'scratch operand']
  %s0 = inlined_call_operand.vmem [shape: s32[1,400], index: 0, kind: input, shape index: {}]
  %s1 = inlined_call_operand.vmem [shape: f32[400,32], index: 1, kind: input, shape index: {}]
  %s2 = inlined_call_operand.vmem [shape: f32[400,3], index: 2, kind: input, shape index: {}]
  %s3 = inlined_call_operand.vmem [shape: f32[32,64], index: 3, kind: input, shape index: {}]
  %s4 = inlined_call_operand.vmem [shape: f32[64,64], index: 4, kind: input, shape index: {}]
  %s5 = inlined_call_operand.vmem [shape: f32[64,6], index: 5, kind: input, shape index: {}]
  %s6 = inlined_call_operand.vmem [shape: f32[1,6], index: 6, kind: input, shape index: {}]
  %s7 = inlined_call_operand.vmem [shape: f32[8,42], index: 7, kind: output, shape index: {}]
  %s8 = sld [smem:[#allocation0]]
  $region46: #{masked_average_pooling.1} parent=0
    _
  %s10 = ssub.s32 1, %s8
  %s11 = scalar_select 0, %s10, %s8
  // Predicated region
  $region2: #{masked_average_pooling.1} parent=0 // pred_check
    _
  $region3: #{masked_average_pooling.1} parent=0 // pred_check_branch
    %13 = sbr.rel (0) target = $region5
  $region4: #{masked_average_pooling.1} parent=0 // pred_region
    _
  $region5: #{masked_average_pooling.1} parent=0 // pred_fallthru
    _
  // Predicated region
  $region6: #{masked_average_pooling.1} parent=0 // pred_check
    _
  $region7: #{masked_average_pooling.1} parent=0 // pred_check_branch
    %15 = sbr.rel (0) target = $region9
  $region8: #{masked_average_pooling.1} parent=0 // pred_region
    _
  $region9: #{masked_average_pooling.1} parent=0 // pred_fallthru
    _
  // Predicated region
  $region10: #{masked_average_pooling.1} parent=0 // pred_check
    _
  $region11: #{masked_average_pooling.1} parent=0 // pred_check_branch
    %17 = sbr.rel (0) target = $region13
  $region12: #{masked_average_pooling.1} parent=0 // pred_region
    _
  $region13: #{masked_average_pooling.1} parent=0 // pred_fallthru
    _
  // Predicated region
  $region14: #{masked_average_pooling.1} parent=0 // pred_check
    _
  $region15: #{masked_average_pooling.1} parent=0 // pred_check_branch
    %19 = sbr.rel (0) target = $region17
  $region16: #{masked_average_pooling.1} parent=0 // pred_region
    _
  $region17: #{masked_average_pooling.1} parent=0 // pred_fallthru
    _
  // Predicated region
  $region18: #{masked_average_pooling.1} parent=0 // pred_check
    _
  $region19: #{masked_average_pooling.1} parent=0 // pred_check_branch
    %21 = sbr.rel (0) target = $region21
  $region20: #{masked_average_pooling.1} parent=0 // pred_region
    _
  $region21: #{masked_average_pooling.1} parent=0 // pred_fallthru
    _
  // Predicated region
  $region22: #{masked_average_pooling.1} parent=0 // pred_check
    _
  $region23: #{masked_average_pooling.1} parent=0 // pred_check_branch
    %23 = sbr.rel (0) target = $region25
  $region24: #{masked_average_pooling.1} parent=0 // pred_region
    _
  $region25: #{masked_average_pooling.1} parent=0 // pred_fallthru
    _
  // Predicated region
  $region26: #{masked_average_pooling.1} parent=0 // pred_check
    _
  $region27: #{masked_average_pooling.1} parent=0 // pred_check_branch
    %25 = sbr.rel (0) target = $region29
  $region28: #{masked_average_pooling.1} parent=0 // pred_region
    _
  $region29: #{masked_average_pooling.1} parent=0 // pred_fallthru
    _
  %p26 = scmp.eq.s32.totalorder 0, 0
  // Predicated region
  $region30: #{masked_average_pooling.1} parent=0 // pred_check
    %p27 = pneg %p26
  $region31: #{masked_average_pooling.1} parent=0 // pred_check_branch
    %29 = sbr.rel (%p27) target = $region33
  $region32: #{masked_average_pooling.1} parent=0 // pred_region
    %vm30 = vcmask 293888
    %31 = vst.msk [vmem:[#allocation2] sm:$0xff] %vm30, 0.0
  $region33: #{masked_average_pooling.1} parent=0 // pred_fallthru
    _
  %v32 = vld [vmem:[%s0] sm:$0xf]
  %v33 = vld [vmem:[%s1] sm:$0xff]
  %v34 = vld [vmem:[%s1 + $0x8] sm:$0xff]
  %v35 = vld [vmem:[%s1 + $0x10] sm:$0xff]
  %v36 = vld [vmem:[%s1 + $0x18] sm:$0xff]
  %v37 = vld [vmem:[%s1 + $0x20] sm:$0xff]
  %v38 = vld [vmem:[%s1 + $0x28] sm:$0xff]
  %v39 = vld [vmem:[%s1 + $0x30] sm:$0xff]
  %v40 = vld [vmem:[%s1 + $0x38] sm:$0xff]
  %v41 = vld [vmem:[%s1 + $0x40] sm:$0xff]
  %v42 = vld [vmem:[%s1 + $0x48] sm:$0xff]
  %v43 = vld [vmem:[%s1 + $0x50] sm:$0xff]
  %v44 = vld [vmem:[%s1 + $0x58] sm:$0xff]
  %v45 = vld [vmem:[%s1 + $0x60] sm:$0xff]
  %v46 = vld [vmem:[%s1 + $0x68] sm:$0xff]
  %v47 = vld [vmem:[%s1 + $0x70] sm:$0xff]
  %v48 = vld [vmem:[%s1 + $0x78] sm:$0xff]
  %v49 = vld [vmem:[%s1 + $0x80] sm:$0xff]
  %v50 = vld [vmem:[%s1 + $0x88] sm:$0xff]
  %v51 = vld [vmem:[%s1 + $0x90] sm:$0xff]
  %v52 = vld [vmem:[%s1 + $0x98] sm:$0xff]
  %v53 = vld [vmem:[%s1 + $0xa0] sm:$0xff]
  %v54 = vld [vmem:[%s1 + $0xa8] sm:$0xff]
  %v55 = vld [vmem:[%s1 + $0xb0] sm:$0xff]
  %v56 = vld [vmem:[%s1 + $0xb8] sm:$0xff]
  %v57 = vld [vmem:[%s1 + $0xc0] sm:$0xff]
  %v58 = vld [vmem:[%s1 + $0xc8] sm:$0xff]
  %v59 = vld [vmem:[%s1 + $0xd0] sm:$0xff]
  %v60 = vld [vmem:[%s1 + $0xd8] sm:$0xff]
  %v61 = vld [vmem:[%s1 + $0xe0] sm:$0xff]
  %v62 = vld [vmem:[%s1 + $0xe8] sm:$0xff]
  %v63 = vld [vmem:[%s1 + $0xf0] sm:$0xff]
  %v64 = vld [vmem:[%s1 + $0xf8] sm:$0xff]
  %v65 = vld [vmem:[%s1 + $0x100] sm:$0xff]
  %v66 = vld [vmem:[%s1 + $0x108] sm:$0xff]
  %v67 = vld [vmem:[%s1 + $0x110] sm:$0xff]
  %v68 = vld [vmem:[%s1 + $0x118] sm:$0xff]
  %v69 = vld [vmem:[%s1 + $0x120] sm:$0xff]
  %v70 = vld [vmem:[%s1 + $0x128] sm:$0xff]
  %v71 = vld [vmem:[%s1 + $0x130] sm:$0xff]
  %v72 = vld [vmem:[%s1 + $0x138] sm:$0xff]
  %v73 = vld [vmem:[%s1 + $0x140] sm:$0xff]
  %v74 = vld [vmem:[%s1 + $0x148] sm:$0xff]
  %v75 = vld [vmem:[%s1 + $0x150] sm:$0xff]
  %v76 = vld [vmem:[%s1 + $0x158] sm:$0xff]
  %v77 = vld [vmem:[%s1 + $0x160] sm:$0xff]
  %v78 = vld [vmem:[%s1 + $0x168] sm:$0xff]
  %v79 = vld [vmem:[%s1 + $0x170] sm:$0xff]
  %v80 = vld [vmem:[%s1 + $0x178] sm:$0xff]
  %v81 = vld [vmem:[%s1 + $0x180] sm:$0xff]
  %v82 = vld [vmem:[%s1 + $0x188] sm:$0xff]
  %v83 = vld [vmem:[%s2] sm:$0xff]
  %v84 = vld [vmem:[%s2 + $0x8] sm:$0xff]
  %v85 = vld [vmem:[%s2 + $0x10] sm:$0xff]
  %v86 = vld [vmem:[%s2 + $0x18] sm:$0xff]
  %v87 = vld [vmem:[%s2 + $0x20] sm:$0xff]
  %v88 = vld [vmem:[%s2 + $0x28] sm:$0xff]
  %v89 = vld [vmem:[%s2 + $0x30] sm:$0xff]
  %v90 = vld [vmem:[%s2 + $0x38] sm:$0xff]
  %v91 = vld [vmem:[%s2 + $0x40] sm:$0xff]
  %v92 = vld [vmem:[%s2 + $0x48] sm:$0xff]
  %v93 = vld [vmem:[%s2 + $0x50] sm:$0xff]
  %v94 = vld [vmem:[%s2 + $0x58] sm:$0xff]
  %v95 = vld [vmem:[%s2 + $0x60] sm:$0xff]
  %v96 = vld [vmem:[%s2 + $0x68] sm:$0xff]
  %v97 = vld [vmem:[%s2 + $0x70] sm:$0xff]
  %v98 = vld [vmem:[%s2 + $0x78] sm:$0xff]
  %v99 = vld [vmem:[%s2 + $0x80] sm:$0xff]
  %v100 = vld [vmem:[%s2 + $0x88] sm:$0xff]
  %v101 = vld [vmem:[%s2 + $0x90] sm:$0xff]
  %v102 = vld [vmem:[%s2 + $0x98] sm:$0xff]
  %v103 = vld [vmem:[%s2 + $0xa0] sm:$0xff]
  %v104 = vld [vmem:[%s2 + $0xa8] sm:$0xff]
  %v105 = vld [vmem:[%s2 + $0xb0] sm:$0xff]
  %v106 = vld [vmem:[%s2 + $0xb8] sm:$0xff]
  %v107 = vld [vmem:[%s2 + $0xc0] sm:$0xff]
  %v108 = vld [vmem:[%s2 + $0xc8] sm:$0xff]
  %v109 = vld [vmem:[%s2 + $0xd0] sm:$0xff]
  %v110 = vld [vmem:[%s2 + $0xd8] sm:$0xff]
  %v111 = vld [vmem:[%s2 + $0xe0] sm:$0xff]
  %v112 = vld [vmem:[%s2 + $0xe8] sm:$0xff]
  %v113 = vld [vmem:[%s2 + $0xf0] sm:$0xff]
  %v114 = vld [vmem:[%s2 + $0xf8] sm:$0xff]
  %v115 = vld [vmem:[%s2 + $0x100] sm:$0xff]
  %v116 = vld [vmem:[%s2 + $0x108] sm:$0xff]
  %v117 = vld [vmem:[%s2 + $0x110] sm:$0xff]
  %v118 = vld [vmem:[%s2 + $0x118] sm:$0xff]
  %v119 = vld [vmem:[%s2 + $0x120] sm:$0xff]
  %v120 = vld [vmem:[%s2 + $0x128] sm:$0xff]
  %v121 = vld [vmem:[%s2 + $0x130] sm:$0xff]
  %v122 = vld [vmem:[%s2 + $0x138] sm:$0xff]
  %v123 = vld [vmem:[%s2 + $0x140] sm:$0xff]
  %v124 = vld [vmem:[%s2 + $0x148] sm:$0xff]
  %v125 = vld [vmem:[%s2 + $0x150] sm:$0xff]
  %v126 = vld [vmem:[%s2 + $0x158] sm:$0xff]
  %v127 = vld [vmem:[%s2 + $0x160] sm:$0xff]
  %v128 = vld [vmem:[%s2 + $0x168] sm:$0xff]
  %v129 = vld [vmem:[%s2 + $0x170] sm:$0xff]
  %v130 = vld [vmem:[%s2 + $0x178] sm:$0xff]
  %v131 = vld [vmem:[%s2 + $0x180] sm:$0xff]
  %v132 = vld [vmem:[%s2 + $0x188] sm:$0xff]
  %v133 = vlaneseq
  %v134 = vshrl.u32 %v133, 7
  %v135 = vlaneseq
  %v136 = vshrl.u32 %v135, 7
  %v137 = vsub.s32 0, %v136
  %v138 = vrot.slane %v32, %v137
  %v139 = vlaneseq
  %v140 = vshrl.u32 %v139, 7
  %v141 = vsub.s32 1, %v140
  %v142 = vrot.slane %v32, %v141
  %v143 = vlaneseq
  %v144 = vshrl.u32 %v143, 7
  %v145 = vsub.s32 2, %v144
  %v146 = vrot.slane %v32, %v145
  %v147 = vlaneseq
  %v148 = vshrl.u32 %v147, 7
  %v149 = vsub.s32 3, %v148
  %v150 = vrot.slane %v32, %v149
  %vm151 = vcmp.eq.s32.totalorder %v134, %v138
  %vm152 = vcmp.eq.s32.totalorder %v134, %v142
  %vm153 = vcmp.eq.s32.totalorder %v134, %v146
  %vm154 = vcmp.eq.s32.totalorder %v134, %v150
  %v155 = vsel %vm151, 1, 0
  %v156 = vsel %vm152, 1, 0
  %v157 = vsel %vm153, 1, 0
  %v158 = vsel %vm154, 1, 0
  %v159 = vcvt.s32.f32 %v155
  %v160 = vcvt.s32.f32 %v156
  %v161 = vcvt.s32.f32 %v157
  %v162 = vcvt.s32.f32 %v158
  %v163 = vld [vmem:[#allocation2] sm:$0xff]
  %vm164 = vcmask 130048
  %v166 = vsel %vm164, %v162, 0
  %168 = vmatprep.subr.mxu0 0.0
  %169 = vmatpush1.msra.mxu0 %v48
  %170 = vmatprep.subr.mxu0 0.0
  %171 = vmatpush1.msra.mxu0 %v47
  %172 = vmatprep.subr.mxu0 0.0
  %173 = vmatpush1.msra.mxu0 %v46
  %174 = vmatprep.subr.mxu0 0.0
  %175 = vmatpush1.msra.mxu0 %v45
  %176 = vmatprep.subr.mxu0 0.0
  %177 = vmatpush1.msra.mxu0 %v44
  %178 = vmatprep.subr.mxu0 0.0
  %179 = vmatpush1.msra.mxu0 %v43
  %180 = vmatprep.subr.mxu0 0.0
  %181 = vmatpush1.msra.mxu0 %v42
  %182 = vmatprep.subr.mxu0 0.0
  %183 = vmatpush1.msra.mxu0 %v41
  %184 = vmatprep.subr.mxu0 0.0
  %185 = vmatpush1.msra.mxu0 %v40
  %186 = vmatprep.subr.mxu0 0.0
  %187 = vmatpush1.msra.mxu0 %v39
  %188 = vmatprep.subr.mxu0 0.0
  %189 = vmatpush1.msra.mxu0 %v38
  %190 = vmatprep.subr.mxu0 0.0
  %191 = vmatpush1.msra.mxu0 %v37
  %192 = vmatprep.subr.mxu0 0.0
  %193 = vmatpush1.msra.mxu0 %v36
  %194 = vmatprep.subr.mxu0 0.0
  %195 = vmatpush1.msra.mxu0 %v35
  %196 = vmatprep.subr.mxu0 0.0
  %197 = vmatpush1.msra.mxu0 %v34
  %198 = vmatprep.subr.mxu0 0.0
  %199 = vmatpush1.msra.mxu0 %v33
  %200 = vmatprep.subr.mxu0 0.0
  %201 = vmatpush2.msra.mxu0 %v64
  %202 = vmatprep.subr.mxu0 0.0
  %203 = vmatpush2.msra.mxu0 %v63
  %204 = vmatprep.subr.mxu0 0.0
  %205 = vmatpush2.msra.mxu0 %v62
  %206 = vmatprep.subr.mxu0 0.0
  %207 = vmatpush2.msra.mxu0 %v61
  %208 = vmatprep.subr.mxu0 0.0
  %209 = vmatpush2.msra.mxu0 %v60
  %210 = vmatprep.subr.mxu0 0.0
  %211 = vmatpush2.msra.mxu0 %v59
  %212 = vmatprep.subr.mxu0 0.0
  %213 = vmatpush2.msra.mxu0 %v58
  %214 = vmatprep.subr.mxu0 0.0
  %215 = vmatpush2.msra.mxu0 %v57
  %216 = vmatprep.subr.mxu0 0.0
  %217 = vmatpush2.msra.mxu0 %v56
  %218 = vmatprep.subr.mxu0 0.0
  %219 = vmatpush2.msra.mxu0 %v55
  %220 = vmatprep.subr.mxu0 0.0
  %221 = vmatpush2.msra.mxu0 %v54
  %222 = vmatprep.subr.mxu0 0.0
  %223 = vmatpush2.msra.mxu0 %v53
  %224 = vmatprep.subr.mxu0 0.0
  %225 = vmatpush2.msra.mxu0 %v52
  %226 = vmatprep.subr.mxu0 0.0
  %227 = vmatpush2.msra.mxu0 %v51
  %228 = vmatprep.subr.mxu0 0.0
  %229 = vmatpush2.msra.mxu0 %v50
  %230 = vmatprep.subr.mxu0 0.0
  %231 = vmatpush2.msra.mxu0 %v49
  %232 = vmatprep.mubr.f32.mxu0 %v160
  %233 = vmatmul.mubr.f32.gmra.mxu0 %v159
  %v234 = vpop.f32.mrf.mxu0
  %v235 = vadd.f32 0.0, %v234
  %v236 = vpop.f32.mrf.mxu0
  %237 = vdwg.mxu0
  %238 = vmatprep.subr.mxu0 0.0
  %239 = vmatpush1.msra.mxu0 %v80
  %240 = vmatprep.subr.mxu0 0.0
  %241 = vmatpush1.msra.mxu0 %v79
  %242 = vmatprep.subr.mxu0 0.0
  %243 = vmatpush1.msra.mxu0 %v78
  %244 = vmatprep.subr.mxu0 0.0
  %245 = vmatpush1.msra.mxu0 %v77
  %246 = vmatprep.subr.mxu0 0.0
  %247 = vmatpush1.msra.mxu0 %v76
  %248 = vmatprep.subr.mxu0 0.0
  %249 = vmatpush1.msra.mxu0 %v75
  %250 = vmatprep.subr.mxu0 0.0
  %251 = vmatpush1.msra.mxu0 %v74
  %252 = vmatprep.subr.mxu0 0.0
  %253 = vmatpush1.msra.mxu0 %v73
  %254 = vmatprep.subr.mxu0 0.0
  %255 = vmatpush1.msra.mxu0 %v72
  %256 = vmatprep.subr.mxu0 0.0
  %257 = vmatpush1.msra.mxu0 %v71
  %258 = vmatprep.subr.mxu0 0.0
  %259 = vmatpush1.msra.mxu0 %v70
  %260 = vmatprep.subr.mxu0 0.0
  %261 = vmatpush1.msra.mxu0 %v69
  %262 = vmatprep.subr.mxu0 0.0
  %263 = vmatpush1.msra.mxu0 %v68
  %264 = vmatprep.subr.mxu0 0.0
  %265 = vmatpush1.msra.mxu0 %v67
  %266 = vmatprep.subr.mxu0 0.0
  %267 = vmatpush1.msra.mxu0 %v66
  %268 = vmatprep.subr.mxu0 0.0
  %269 = vmatpush1.msra.mxu0 %v65
  %270 = vmatprep.subr.mxu0 0.0
  %271 = vmatpush2.msra.mxu0 0.0
  %272 = vmatprep.subr.mxu0 0.0
  %273 = vmatpush2.msra.mxu0 0.0
  %274 = vmatprep.subr.mxu0 0.0
  %275 = vmatpush2.msra.mxu0 0.0
  %276 = vmatprep.subr.mxu0 0.0
  %277 = vmatpush2.msra.mxu0 0.0
  %278 = vmatprep.subr.mxu0 0.0
  %279 = vmatpush2.msra.mxu0 0.0
  %280 = vmatprep.subr.mxu0 0.0
  %281 = vmatpush2.msra.mxu0 0.0
  %282 = vmatprep.subr.mxu0 0.0
  %283 = vmatpush2.msra.mxu0 0.0
  %284 = vmatprep.subr.mxu0 0.0
  %285 = vmatpush2.msra.mxu0 0.0
  %286 = vmatprep.subr.mxu0 0.0
  %287 = vmatpush2.msra.mxu0 0.0
  %288 = vmatprep.subr.mxu0 0.0
  %289 = vmatpush2.msra.mxu0 0.0
  %290 = vmatprep.subr.mxu0 0.0
  %291 = vmatpush2.msra.mxu0 0.0
  %292 = vmatprep.subr.mxu0 0.0
  %293 = vmatpush2.msra.mxu0 0.0
  %294 = vmatprep.subr.mxu0 0.0
  %295 = vmatpush2.msra.mxu0 0.0
  %296 = vmatprep.subr.mxu0 0.0
  %297 = vmatpush2.msra.mxu0 0.0
  %298 = vmatprep.subr.mxu0 0.0
  %299 = vmatpush2.msra.mxu0 %v82
  %300 = vmatprep.subr.mxu0 0.0
  %301 = vmatpush2.msra.mxu0 %v81
  %302 = vmatprep.mubr.f32.mxu0 %v166
  %303 = vmatmul.mubr.f32.gmra.mxu0 %v161
  %v304 = vpop.f32.mrf.mxu0
  %v305 = vadd.f32 %v235, %v304
  %v306 = vpop.f32.mrf.mxu0
  %307 = vdwg.mxu0
  %v308 = vadd.f32 %v163, %v305
  %vm309 = vcmask 261120
  %310 = vst.msk [vmem:[#allocation2] sm:$0xff] %vm309, %v308
  %v311 = vld [vmem:[#allocation2] sm:$0xff]
  %312 = vmatprep.subr.mxu0 0.0
  %313 = vmatpush1.msra.mxu0 %v98
  %314 = vmatprep.subr.mxu0 0.0
  %315 = vmatpush1.msra.mxu0 %v97
  %316 = vmatprep.subr.mxu0 0.0
  %317 = vmatpush1.msra.mxu0 %v96
  %318 = vmatprep.subr.mxu0 0.0
  %319 = vmatpush1.msra.mxu0 %v95
  %320 = vmatprep.subr.mxu0 0.0
  %321 = vmatpush1.msra.mxu0 %v94
  %322 = vmatprep.subr.mxu0 0.0
  %323 = vmatpush1.msra.mxu0 %v93
  %324 = vmatprep.subr.mxu0 0.0
  %325 = vmatpush1.msra.mxu0 %v92
  %326 = vmatprep.subr.mxu0 0.0
  %327 = vmatpush1.msra.mxu0 %v91
  %328 = vmatprep.subr.mxu0 0.0
  %329 = vmatpush1.msra.mxu0 %v90
  %330 = vmatprep.subr.mxu0 0.0
  %331 = vmatpush1.msra.mxu0 %v89
  %332 = vmatprep.subr.mxu0 0.0
  %333 = vmatpush1.msra.mxu0 %v88
  %334 = vmatprep.subr.mxu0 0.0
  %335 = vmatpush1.msra.mxu0 %v87
  %336 = vmatprep.subr.mxu0 0.0
  %337 = vmatpush1.msra.mxu0 %v86
  %338 = vmatprep.subr.mxu0 0.0
  %339 = vmatpush1.msra.mxu0 %v85
  %340 = vmatprep.subr.mxu0 0.0
  %341 = vmatpush1.msra.mxu0 %v84
  %342 = vmatprep.subr.mxu0 0.0
  %343 = vmatpush1.msra.mxu0 %v83
  %344 = vmatprep.subr.mxu0 0.0
  %345 = vmatpush2.msra.mxu0 %v114
  %346 = vmatprep.subr.mxu0 0.0
  %347 = vmatpush2.msra.mxu0 %v113
  %348 = vmatprep.subr.mxu0 0.0
  %349 = vmatpush2.msra.mxu0 %v112
  %350 = vmatprep.subr.mxu0 0.0
  %351 = vmatpush2.msra.mxu0 %v111
  %352 = vmatprep.subr.mxu0 0.0
  %353 = vmatpush2.msra.mxu0 %v110
  %354 = vmatprep.subr.mxu0 0.0
  %355 = vmatpush2.msra.mxu0 %v109
  %356 = vmatprep.subr.mxu0 0.0
  %357 = vmatpush2.msra.mxu0 %v108
  %358 = vmatprep.subr.mxu0 0.0
  %359 = vmatpush2.msra.mxu0 %v107
  %360 = vmatprep.subr.mxu0 0.0
  %361 = vmatpush2.msra.mxu0 %v106
  %362 = vmatprep.subr.mxu0 0.0
  %363 = vmatpush2.msra.mxu0 %v105
  %364 = vmatprep.subr.mxu0 0.0
  %365 = vmatpush2.msra.mxu0 %v104
  %366 = vmatprep.subr.mxu0 0.0
  %367 = vmatpush2.msra.mxu0 %v103
  %368 = vmatprep.subr.mxu0 0.0
  %369 = vmatpush2.msra.mxu0 %v102
  %370 = vmatprep.subr.mxu0 0.0
  %371 = vmatpush2.msra.mxu0 %v101
  %372 = vmatprep.subr.mxu0 0.0
  %373 = vmatpush2.msra.mxu0 %v100
  %374 = vmatprep.subr.mxu0 0.0
  %375 = vmatpush2.msra.mxu0 %v99
  %376 = vmatprep.mubr.f32.mxu0 %v160
  %377 = vmatmul.mubr.f32.gmra.mxu0 %v159
  %v378 = vpop.f32.mrf.mxu0
  %v379 = vadd.f32 0.0, %v378
  %v380 = vpop.f32.mrf.mxu0
  %381 = vdwg.mxu0
  %382 = vmatprep.subr.mxu0 0.0
  %383 = vmatpush1.msra.mxu0 %v130
  %384 = vmatprep.subr.mxu0 0.0
  %385 = vmatpush1.msra.mxu0 %v129
  %386 = vmatprep.subr.mxu0 0.0
  %387 = vmatpush1.msra.mxu0 %v128
  %388 = vmatprep.subr.mxu0 0.0
  %389 = vmatpush1.msra.mxu0 %v127
  %390 = vmatprep.subr.mxu0 0.0
  %391 = vmatpush1.msra.mxu0 %v126
  %392 = vmatprep.subr.mxu0 0.0
  %393 = vmatpush1.msra.mxu0 %v125
  %394 = vmatprep.subr.mxu0 0.0
  %395 = vmatpush1.msra.mxu0 %v124
  %396 = vmatprep.subr.mxu0 0.0
  %397 = vmatpush1.msra.mxu0 %v123
  %398 = vmatprep.subr.mxu0 0.0
  %399 = vmatpush1.msra.mxu0 %v122
  %400 = vmatprep.subr.mxu0 0.0
  %401 = vmatpush1.msra.mxu0 %v121
  %402 = vmatprep.subr.mxu0 0.0
  %403 = vmatpush1.msra.mxu0 %v120
  %404 = vmatprep.subr.mxu0 0.0
  %405 = vmatpush1.msra.mxu0 %v119
  %406 = vmatprep.subr.mxu0 0.0
  %407 = vmatpush1.msra.mxu0 %v118
  %408 = vmatprep.subr.mxu0 0.0
  %409 = vmatpush1.msra.mxu0 %v117
  %410 = vmatprep.subr.mxu0 0.0
  %411 = vmatpush1.msra.mxu0 %v116
  %412 = vmatprep.subr.mxu0 0.0
  %413 = vmatpush1.msra.mxu0 %v115
  %414 = vmatprep.subr.mxu0 0.0
  %415 = vmatpush2.msra.mxu0 0.0
  %416 = vmatprep.subr.mxu0 0.0
  %417 = vmatpush2.msra.mxu0 0.0
  %418 = vmatprep.subr.mxu0 0.0
  %419 = vmatpush2.msra.mxu0 0.0
  %420 = vmatprep.subr.mxu0 0.0
  %421 = vmatpush2.msra.mxu0 0.0
  %422 = vmatprep.subr.mxu0 0.0
  %423 = vmatpush2.msra.mxu0 0.0
  %424 = vmatprep.subr.mxu0 0.0
  %425 = vmatpush2.msra.mxu0 0.0
  %426 = vmatprep.subr.mxu0 0.0
  %427 = vmatpush2.msra.mxu0 0.0
  %428 = vmatprep.subr.mxu0 0.0
  %429 = vmatpush2.msra.mxu0 0.0
  %430 = vmatprep.subr.mxu0 0.0
  %431 = vmatpush2.msra.mxu0 0.0
  %432 = vmatprep.subr.mxu0 0.0
  %433 = vmatpush2.msra.mxu0 0.0
  %434 = vmatprep.subr.mxu0 0.0
  %435 = vmatpush2.msra.mxu0 0.0
  %436 = vmatprep.subr.mxu0 0.0
  %437 = vmatpush2.msra.mxu0 0.0
  %438 = vmatprep.subr.mxu0 0.0
  %439 = vmatpush2.msra.mxu0 0.0
  %440 = vmatprep.subr.mxu0 0.0
  %441 = vmatpush2.msra.mxu0 0.0
  %442 = vmatprep.subr.mxu0 0.0
  %443 = vmatpush2.msra.mxu0 %v132
  %444 = vmatprep.subr.mxu0 0.0
  %445 = vmatpush2.msra.mxu0 %v131
  %446 = vmatprep.mubr.f32.mxu0 %v166
  %447 = vmatmul.mubr.f32.gmra.mxu0 %v161
  %v448 = vpop.f32.mrf.mxu0
  %v449 = vadd.f32 %v379, %v448
  %v450 = vpop.f32.mrf.mxu0
  %451 = vdwg.mxu0
  %453 = vrot.lane.b32.xlu0 %v449, 32
  %v454 = vpop.permute.xlu0 %453
  %v456 = vadd.f32 %v311, %v454
  %vm457 = vcmask 285952
  %458 = vst.msk [vmem:[#allocation2] sm:$0xff] %vm457, %v456
  %v459 = vld [vmem:[#allocation2] sm:$0xff]
  %v460 = vadd.f32 %v159, %v160
  %v461 = vadd.f32 %v460, %v161
  %v462 = vsel %vm164, %v162, 0.0
  %v463 = vadd.f32 %v461, %v462
  %464 = vadd.xlane.f32.xlu0 %v463
  %v465 = vpop.xlane.xlu0 %464
  %v466 = vadd.f32 %v459, %v465
  %vm467 = vcmask 294168
  %468 = vst.msk [vmem:[#allocation2] sm:$0xff] %vm467, %v466
  // Predicated region
  $region34: #{masked_average_pooling.1} parent=0 // pred_check
    %p469 = pneg %p26
  $region35: #{masked_average_pooling.1} parent=0 // pred_check_branch
    %471 = sbr.rel (%p469) target = $region37
  $region36: #{masked_average_pooling.1} parent=0 // pred_region
    %v472 = vld [vmem:[#allocation2] sm:$0xff]
    %v473 = vmax.f32 %v472, 1.0
    %v474 = vrcp.pop %v473
    %476 = vset.pattern.permute.xlu0 35
    %477 = vperm.xlu0 %476, %v474
    %v478 = vpop.permute.xlu0 %477
    %v480 = vmul.f32 %v472, %v478
    %v481 = vld [vmem:[%s3] sm:$0xff]
    %v482 = vld [vmem:[%s3 + $0x8] sm:$0xff]
    %v483 = vld [vmem:[%s3 + $0x10] sm:$0xff]
    %v484 = vld [vmem:[%s3 + $0x18] sm:$0xff]
    %v486 = vsel %vm309, %v480, 0
    %488 = vmatprep.subr.mxu0 0.0
    %489 = vmatpush1.msra.mxu0 0.0
    %490 = vmatprep.subr.mxu0 0.0
    %491 = vmatpush1.msra.mxu0 0.0
    %492 = vmatprep.subr.mxu0 0.0
    %493 = vmatpush1.msra.mxu0 0.0
    %494 = vmatprep.subr.mxu0 0.0
    %495 = vmatpush1.msra.mxu0 0.0
    %496 = vmatprep.subr.mxu0 0.0
    %497 = vmatpush1.msra.mxu0 0.0
    %498 = vmatprep.subr.mxu0 0.0
    %499 = vmatpush1.msra.mxu0 0.0
    %500 = vmatprep.subr.mxu0 0.0
    %501 = vmatpush1.msra.mxu0 0.0
    %502 = vmatprep.subr.mxu0 0.0
    %503 = vmatpush1.msra.mxu0 0.0
    %504 = vmatprep.subr.mxu0 0.0
    %505 = vmatpush1.msra.mxu0 0.0
    %506 = vmatprep.subr.mxu0 0.0
    %507 = vmatpush1.msra.mxu0 0.0
    %508 = vmatprep.subr.mxu0 0.0
    %509 = vmatpush1.msra.mxu0 0.0
    %510 = vmatprep.subr.mxu0 0.0
    %511 = vmatpush1.msra.mxu0 0.0
    %512 = vmatprep.subr.mxu0 0.0
    %513 = vmatpush1.msra.mxu0 %v484
    %514 = vmatprep.subr.mxu0 0.0
    %515 = vmatpush1.msra.mxu0 %v483
    %516 = vmatprep.subr.mxu0 0.0
    %517 = vmatpush1.msra.mxu0 %v482
    %518 = vmatprep.subr.mxu0 0.0
    %519 = vmatpush1.msra.mxu0 %v481
    %520 = vmatprep.subr.mxu0 0.0
    %521 = vmatpush2.msra.mxu0 0.0
    %522 = vmatprep.subr.mxu0 0.0
    %523 = vmatpush2.msra.mxu0 0.0
    %524 = vmatprep.subr.mxu0 0.0
    %525 = vmatpush2.msra.mxu0 0.0
    %526 = vmatprep.subr.mxu0 0.0
    %527 = vmatpush2.msra.mxu0 0.0
    %528 = vmatprep.subr.mxu0 0.0
    %529 = vmatpush2.msra.mxu0 0.0
    %530 = vmatprep.subr.mxu0 0.0
    %531 = vmatpush2.msra.mxu0 0.0
    %532 = vmatprep.subr.mxu0 0.0
    %533 = vmatpush2.msra.mxu0 0.0
    %534 = vmatprep.subr.mxu0 0.0
    %535 = vmatpush2.msra.mxu0 0.0
    %536 = vmatprep.subr.mxu0 0.0
    %537 = vmatpush2.msra.mxu0 0.0
    %538 = vmatprep.subr.mxu0 0.0
    %539 = vmatpush2.msra.mxu0 0.0
    %540 = vmatprep.subr.mxu0 0.0
    %541 = vmatpush2.msra.mxu0 0.0
    %542 = vmatprep.subr.mxu0 0.0
    %543 = vmatpush2.msra.mxu0 0.0
    %544 = vmatprep.subr.mxu0 0.0
    %545 = vmatpush2.msra.mxu0 0.0
    %546 = vmatprep.subr.mxu0 0.0
    %547 = vmatpush2.msra.mxu0 0.0
    %548 = vmatprep.subr.mxu0 0.0
    %549 = vmatpush2.msra.mxu0 0.0
    %550 = vmatprep.subr.mxu0 0.0
    %551 = vmatpush2.msra.mxu0 0.0
    %552 = vmatprep.mubr.f32.mxu0 0.0
    %553 = vmatmul.mubr.f32.gmra.mxu0 %v486
    %v554 = vpop.f32.mrf.mxu0
    %v555 = vadd.f32 0.0, %v554
    %v556 = vpop.f32.mrf.mxu0
    %557 = vdwg.mxu0
    %v558 = vmax.f32 %v555, 0.0
    %v559 = vld [vmem:[%s4] sm:$0xff]
    %v560 = vld [vmem:[%s4 + $0x8] sm:$0xff]
    %v561 = vld [vmem:[%s4 + $0x10] sm:$0xff]
    %v562 = vld [vmem:[%s4 + $0x18] sm:$0xff]
    %v563 = vld [vmem:[%s4 + $0x20] sm:$0xff]
    %v564 = vld [vmem:[%s4 + $0x28] sm:$0xff]
    %v565 = vld [vmem:[%s4 + $0x30] sm:$0xff]
    %v566 = vld [vmem:[%s4 + $0x38] sm:$0xff]
    %vm567 = vcmask 523264
    %v569 = vsel %vm567, %v558, 0
    %571 = vmatprep.subr.mxu0 0.0
    %572 = vmatpush1.msra.mxu0 0.0
    %573 = vmatprep.subr.mxu0 0.0
    %574 = vmatpush1.msra.mxu0 0.0
    %575 = vmatprep.subr.mxu0 0.0
    %576 = vmatpush1.msra.mxu0 0.0
    %577 = vmatprep.subr.mxu0 0.0
    %578 = vmatpush1.msra.mxu0 0.0
    %579 = vmatprep.subr.mxu0 0.0
    %580 = vmatpush1.msra.mxu0 0.0
    %581 = vmatprep.subr.mxu0 0.0
    %582 = vmatpush1.msra.mxu0 0.0
    %583 = vmatprep.subr.mxu0 0.0
    %584 = vmatpush1.msra.mxu0 0.0
    %585 = vmatprep.subr.mxu0 0.0
    %586 = vmatpush1.msra.mxu0 0.0
    %587 = vmatprep.subr.mxu0 0.0
    %588 = vmatpush1.msra.mxu0 %v566
    %589 = vmatprep.subr.mxu0 0.0
    %590 = vmatpush1.msra.mxu0 %v565
    %591 = vmatprep.subr.mxu0 0.0
    %592 = vmatpush1.msra.mxu0 %v564
    %593 = vmatprep.subr.mxu0 0.0
    %594 = vmatpush1.msra.mxu0 %v563
    %595 = vmatprep.subr.mxu0 0.0
    %596 = vmatpush1.msra.mxu0 %v562
    %597 = vmatprep.subr.mxu0 0.0
    %598 = vmatpush1.msra.mxu0 %v561
    %599 = vmatprep.subr.mxu0 0.0
    %600 = vmatpush1.msra.mxu0 %v560
    %601 = vmatprep.subr.mxu0 0.0
    %602 = vmatpush1.msra.mxu0 %v559
    %603 = vmatprep.subr.mxu0 0.0
    %604 = vmatpush2.msra.mxu0 0.0
    %605 = vmatprep.subr.mxu0 0.0
    %606 = vmatpush2.msra.mxu0 0.0
    %607 = vmatprep.subr.mxu0 0.0
    %608 = vmatpush2.msra.mxu0 0.0
    %609 = vmatprep.subr.mxu0 0.0
    %610 = vmatpush2.msra.mxu0 0.0
    %611 = vmatprep.subr.mxu0 0.0
    %612 = vmatpush2.msra.mxu0 0.0
    %613 = vmatprep.subr.mxu0 0.0
    %614 = vmatpush2.msra.mxu0 0.0
    %615 = vmatprep.subr.mxu0 0.0
    %616 = vmatpush2.msra.mxu0 0.0
    %617 = vmatprep.subr.mxu0 0.0
    %618 = vmatpush2.msra.mxu0 0.0
    %619 = vmatprep.subr.mxu0 0.0
    %620 = vmatpush2.msra.mxu0 0.0
    %621 = vmatprep.subr.mxu0 0.0
    %622 = vmatpush2.msra.mxu0 0.0
    %623 = vmatprep.subr.mxu0 0.0
    %624 = vmatpush2.msra.mxu0 0.0
    %625 = vmatprep.subr.mxu0 0.0
    %626 = vmatpush2.msra.mxu0 0.0
    %627 = vmatprep.subr.mxu0 0.0
    %628 = vmatpush2.msra.mxu0 0.0
    %629 = vmatprep.subr.mxu0 0.0
    %630 = vmatpush2.msra.mxu0 0.0
    %631 = vmatprep.subr.mxu0 0.0
    %632 = vmatpush2.msra.mxu0 0.0
    %633 = vmatprep.subr.mxu0 0.0
    %634 = vmatpush2.msra.mxu0 0.0
    %635 = vmatprep.mubr.f32.mxu0 0.0
    %636 = vmatmul.mubr.f32.gmra.mxu0 %v569
    %v637 = vpop.f32.mrf.mxu0
    %v638 = vadd.f32 0.0, %v637
    %v639 = vpop.f32.mrf.mxu0
    %640 = vdwg.mxu0
    %v641 = vmax.f32 %v638, 0.0
    %v642 = vld [vmem:[%s5] sm:$0xff]
    %v643 = vld [vmem:[%s5 + $0x8] sm:$0xff]
    %v644 = vld [vmem:[%s5 + $0x10] sm:$0xff]
    %v645 = vld [vmem:[%s5 + $0x18] sm:$0xff]
    %v646 = vld [vmem:[%s5 + $0x20] sm:$0xff]
    %v647 = vld [vmem:[%s5 + $0x28] sm:$0xff]
    %v648 = vld [vmem:[%s5 + $0x30] sm:$0xff]
    %v649 = vld [vmem:[%s5 + $0x38] sm:$0xff]
    %v650 = vld [vmem:[%s6] sm:$0x1]
    %v652 = vlaneseq
    %v653 = vshrl.u32 %v652, 7
    %v654 = vsub.s32 0, %v653
    %v655 = vrot.slane %v650, %v654
    %v658 = vsel %vm567, %v641, 0
    %660 = vmatprep.subr.mxu0 0.0
    %661 = vmatpush1.msra.mxu0 0.0
    %662 = vmatprep.subr.mxu0 0.0
    %663 = vmatpush1.msra.mxu0 0.0
    %664 = vmatprep.subr.mxu0 0.0
    %665 = vmatpush1.msra.mxu0 0.0
    %666 = vmatprep.subr.mxu0 0.0
    %667 = vmatpush1.msra.mxu0 0.0
    %668 = vmatprep.subr.mxu0 0.0
    %669 = vmatpush1.msra.mxu0 0.0
    %670 = vmatprep.subr.mxu0 0.0
    %671 = vmatpush1.msra.mxu0 0.0
    %672 = vmatprep.subr.mxu0 0.0
    %673 = vmatpush1.msra.mxu0 0.0
    %674 = vmatprep.subr.mxu0 0.0
    %675 = vmatpush1.msra.mxu0 0.0
    %676 = vmatprep.subr.mxu0 0.0
    %677 = vmatpush1.msra.mxu0 %v649
    %678 = vmatprep.subr.mxu0 0.0
    %679 = vmatpush1.msra.mxu0 %v648
    %680 = vmatprep.subr.mxu0 0.0
    %681 = vmatpush1.msra.mxu0 %v647
    %682 = vmatprep.subr.mxu0 0.0
    %683 = vmatpush1.msra.mxu0 %v646
    %684 = vmatprep.subr.mxu0 0.0
    %685 = vmatpush1.msra.mxu0 %v645
    %686 = vmatprep.subr.mxu0 0.0
    %687 = vmatpush1.msra.mxu0 %v644
    %688 = vmatprep.subr.mxu0 0.0
    %689 = vmatpush1.msra.mxu0 %v643
    %690 = vmatprep.subr.mxu0 0.0
    %691 = vmatpush1.msra.mxu0 %v642
    %692 = vmatprep.subr.mxu0 0.0
    %693 = vmatpush2.msra.mxu0 0.0
    %694 = vmatprep.subr.mxu0 0.0
    %695 = vmatpush2.msra.mxu0 0.0
    %696 = vmatprep.subr.mxu0 0.0
    %697 = vmatpush2.msra.mxu0 0.0
    %698 = vmatprep.subr.mxu0 0.0
    %699 = vmatpush2.msra.mxu0 0.0
    %700 = vmatprep.subr.mxu0 0.0
    %701 = vmatpush2.msra.mxu0 0.0
    %702 = vmatprep.subr.mxu0 0.0
    %703 = vmatpush2.msra.mxu0 0.0
    %704 = vmatprep.subr.mxu0 0.0
    %705 = vmatpush2.msra.mxu0 0.0
    %706 = vmatprep.subr.mxu0 0.0
    %707 = vmatpush2.msra.mxu0 0.0
    %708 = vmatprep.subr.mxu0 0.0
    %709 = vmatpush2.msra.mxu0 0.0
    %710 = vmatprep.subr.mxu0 0.0
    %711 = vmatpush2.msra.mxu0 0.0
    %712 = vmatprep.subr.mxu0 0.0
    %713 = vmatpush2.msra.mxu0 0.0
    %714 = vmatprep.subr.mxu0 0.0
    %715 = vmatpush2.msra.mxu0 0.0
    %716 = vmatprep.subr.mxu0 0.0
    %717 = vmatpush2.msra.mxu0 0.0
    %718 = vmatprep.subr.mxu0 0.0
    %719 = vmatpush2.msra.mxu0 0.0
    %720 = vmatprep.subr.mxu0 0.0
    %721 = vmatpush2.msra.mxu0 0.0
    %722 = vmatprep.subr.mxu0 0.0
    %723 = vmatpush2.msra.mxu0 0.0
    %724 = vmatprep.mubr.f32.mxu0 0.0
    %725 = vmatmul.mubr.f32.gmra.mxu0 %v658
    %v726 = vpop.f32.mrf.mxu0
    %v727 = vadd.f32 %v655, %v726
    %v728 = vpop.f32.mrf.mxu0
    %729 = vdwg.mxu0
    %731 = vrot.lane.b32.xlu0 %v727, 36
    %v732 = vpop.permute.xlu0 %731
    %vm734 = vcmask 285696
    %v735 = vsel %vm734, %v480, %v472
    %vm736 = vcmask 293888
    %v737 = vsel %vm736, %v735, %v732
    %vm738 = vcmask 343040
    %739 = vst.msk [vmem:[%s7] sm:$0xff] %vm738, %v737
  $region37: #{masked_average_pooling.1} parent=0 // pred_fallthru
    _
  // Predicated region
  $region38: #{masked_average_pooling.1} parent=0 // pred_check
    _
  $region39: #{masked_average_pooling.1} parent=0 // pred_check_branch
    %741 = sbr.rel (0) target = $region41
  $region40: #{masked_average_pooling.1} parent=0 // pred_region
    _
  $region41: #{masked_average_pooling.1} parent=0 // pred_fallthru
    _
  // Predicated region
  $region42: #{masked_average_pooling.1} parent=0 // pred_check
    _
  $region43: #{masked_average_pooling.1} parent=0 // pred_check_branch
    %743 = sbr.rel (0) target = $region45
  $region44: #{masked_average_pooling.1} parent=0 // pred_region
    _
  $region45: #{masked_average_pooling.1} parent=0 // pred_fallthru
    _

</llo_original>
